<compile_context>
chip_gen: v7x
topology: tpu7x:2x2x1
jax: 0.10.0
libtpu: 0.0.40
codegen_flags: <defaults>
</compile_context>

<pallas_src>
import jax
import jax.numpy as jnp
from jax.experimental import pallas as pl
from jax.experimental.pallas import tpu as pltpu

ACT_DIM = 36          # hidden width of the activation MLP (Linear(3H, 36))
ACT_PAD = 128         # zero-padded to one full lane width

_WEIGHT_NAMES = ("w1t", "b1", "wa1_t", "wa1_h", "wa1_x", "ba1",
                 "wa2_row", "ba2", "w2_h", "w2_t", "b2")


def din_kernel(tgt_ref, hist_ref,
               w1_ref, b1_ref,
               wa1t_ref, wa1h_ref, wa1x_ref, ba1_ref,
               wa2_ref, ba2_ref,
               w2h_ref, w2t_ref, b2_ref,
               out_ref,
               t_sc, a1t_sc, wb_sc, hacc_sc):
    f32 = jnp.float32
    s = pl.program_id(1)

    # ---- per-batch-tile setup (first sequence chunk only) --------------------
    @pl.when(s == 0)
    def _init():
        # ln1: t = target @ W1^T + b1                                    (TB, H)
        t = jnp.dot(tgt_ref[...], w1_ref[...], preferred_element_type=f32) + b1_ref[...]
        t_sc[...] = t
        # Target term of the first activation layer (constant over the sequence),
        # fused with its bias.  Padded lanes (>= 36) stay exactly zero.
        a1t_sc[...] = jnp.dot(t, wa1t_ref[...], preferred_element_type=f32) + ba1_ref[...]
        # Fused per-row weight:  hist @ Wh + (hist*t) @ Wx == hist @ (Wh + diag(t) Wx)
        # -> removes the (TB, TS, H) hist*t temp and one matmul per chunk.
        wb = wa1h_ref[...][None, :, :] + t[:, :, None] * wa1x_ref[...][None, :, :]
        wb_sc[...] = wb.astype(wb_sc.dtype)
        hacc_sc[...] = jnp.zeros_like(hacc_sc)

    # ---- per sequence chunk ---------------------------------------------------
    hist_c = hist_ref[...]                                     # (TB, TS, H), stored dtype
    a1 = jnp.einsum('bsh,bhk->bsk', hist_c, wb_sc[...],
                    preferred_element_type=f32) + a1t_sc[...][:, None, :]
    a1 = jnp.maximum(a1, 0.01 * a1)                            # LeakyReLU (slope 0.01)
    # TODO(synk): nn.Dropout is identity in eval/inference mode; no dropout RNG applied.

    # Linear(36, 1) as broadcast-multiply + lane reduction (no N=1 MXU matmul).
    aw = jnp.sum(a1 * wa2_ref[...], axis=-1, keepdims=True) + ba2_ref[...]   # (TB, TS, 1)

    # Weighted sum over this sequence chunk, accumulated in f32 across chunks.
    hacc_sc[...] += jnp.sum(hist_c * aw, axis=1)               # (TB, H)

    # ---- finalize: ln2 on concat([h, t]) after the last chunk ------------------
    @pl.when(s == pl.num_programs(1) - 1)
    def _finalize():
        out = (jnp.dot(hacc_sc[...], w2h_ref[...], preferred_element_type=f32)
               + jnp.dot(t_sc[...], w2t_ref[...], preferred_element_type=f32)
               + b2_ref[...])
        out_ref[...] = out.astype(out_ref.dtype)


def prepare_params(params):
    """One-time weight re-layout for the kernel (hoisted off the forward path)."""
    w1, b1, w2, b2, wa1, ba1, wa2, ba2 = (params[k] for k in
                                          ("w1", "b1", "w2", "b2", "wa1", "ba1", "wa2", "ba2"))
    H = w1.shape[0]
    A = wa1.shape[0]                                   # 36
    lane_pad = ((0, 0), (0, ACT_PAD - A))

    wa1_all = wa1.T                                    # (3H, 36); concat order [hist, t, hist*t]
    w2_all = w2.T                                      # (2H, H);  concat order [h, t]
    return dict(
        w1t=w1.T,                                      # (I, H)
        b1=b1.reshape(1, H),
        wa1_h=jnp.pad(wa1_all[:H], lane_pad),          # (H, 128)
        wa1_t=jnp.pad(wa1_all[H:2 * H], lane_pad),     # (H, 128)
        wa1_x=jnp.pad(wa1_all[2 * H:], lane_pad),      # (H, 128)
        ba1=jnp.pad(ba1.reshape(1, A), lane_pad),      # (1, 128)
        wa2_row=jnp.pad(wa2.reshape(1, A), lane_pad),  # (1, 128)
        ba2=ba2.reshape(1, 1),                         # (1, 1)
        w2_h=w2_all[:H],                               # (H, H)
        w2_t=w2_all[H:],                               # (H, H)
        b2=b2.reshape(1, H),
    )


def _physical_vmem_bytes():
    """Generation-aware VMEM capacity (64 MiB on v7x, 128 MiB on v5e/v6e)."""
    try:
        info = pltpu.get_tpu_info()
        for attr in ("vmem_capacity_bytes", "vmem_bytes", "vmem_size_bytes"):
            v = getattr(info, attr, None)
            if v:
                return int(v)
    except Exception:
        pass
    return 128 << 20


def din_forward(target, histories, prep, *, batch_tile=64, seq_chunk=256,
                hist_dtype=jnp.bfloat16):
    """target: (B, 1, I); histories: (B, S, H) -> (B, H) float32.

    `hist_dtype=jnp.bfloat16` (default) halves HBM traffic on this memory-bound
    kernel and uses the native bf16 MXU path; pass jnp.float32 (or None) for a
    bit-faithful f32 path.
    """
    B, _, I = target.shape
    _, S, H = histories.shape

    tgt2d = target[:, 0, :].astype(jnp.float32)        # target is tiny; keep f32
    if hist_dtype is not None:
        histories = histories.astype(hist_dtype)
    itemsize = histories.dtype.itemsize
    is_bf16 = histories.dtype == jnp.bfloat16

    sub_min = 16 if is_bf16 else 8                     # bf16 packs 2 rows/sublane
    seq_min = sub_min

    # --- batch tile -------------------------------------------------------------
    TB = min(batch_tile, B)
    if TB < B:
        TB = max(sub_min, (TB // sub_min) * sub_min)
    # keep >= 2 batch tiles when possible so v7x's 2 TensorCores both get work
    if B >= 2 * sub_min:
        half = ((pl.cdiv(B, 2) + sub_min - 1) // sub_min) * sub_min
        TB = min(TB, half)

    # --- sequence tile (pad S up; never shrink TS to odd/tiny sizes) -------------
    TS = min(seq_chunk, S)
    TS = ((TS + seq_min - 1) // seq_min) * seq_min

    # --- generation-aware VMEM budget & tile fitting ------------------------------
    weight_bytes = sum(prep[n].size * prep[n].dtype.itemsize for n in _WEIGHT_NAMES)
    phys = _physical_vmem_bytes()
    vmem_cap = int(0.75 * phys)                        # ~48 MiB v7x, ~96 MiB v5e/v6e

    def est(tb, ts):
        hist_buf = 2 * tb * ts * H * itemsize          # double-buffered history chunk
        io_buf = 2 * tb * (I + H) * 4                  # target-in + out blocks
        scratch = tb * (2 * H + ACT_PAD) * 4 + tb * H * ACT_PAD * itemsize
        interm = tb * ts * (3 * ACT_PAD + H) * 4       # a1 / leaky / aw temporaries
        # NOTE: weights have a fixed (0,0) index_map so Pallas does not re-DMA them;
        # they are counted double-buffered here for headroom.
        return hist_buf + io_buf + 2 * weight_bytes + scratch + interm

    while TS > seq_min and est(TB, TS) > vmem_cap:
        TS = max(seq_min, ((TS // 2 + seq_min - 1) // seq_min) * seq_min)
    while TB > sub_min and est(TB, TS) > vmem_cap:
        TB = max(sub_min, ((TB // 2 + sub_min - 1) // sub_min) * sub_min)

    Bp = pl.cdiv(B, TB) * TB
    Sp = pl.cdiv(S, TS) * TS
    if Bp != B:
        tgt2d = jnp.pad(tgt2d, ((0, Bp - B), (0, 0)))
    if Bp != B or Sp != S:
        # zero history rows contribute exactly 0 to h
        histories = jnp.pad(histories, ((0, Bp - B), (0, Sp - S), (0, 0)))

    nb, ns = Bp // TB, Sp // TS
    fixed = lambda i, s: (0, 0)

    in_specs = ([pl.BlockSpec((TB, I), lambda i, s: (i, 0)),
                 pl.BlockSpec((TB, TS, H), lambda i, s: (i, s, 0))]
                + [pl.BlockSpec(prep[n].shape, fixed) for n in _WEIGHT_NAMES])
    out_spec = pl.BlockSpec((TB, H), lambda i, s: (i, 0))

    scratch_shapes = [
        pltpu.VMEM((TB, H), jnp.float32),              # t (ln1 output, reused by ln2)
        pltpu.VMEM((TB, ACT_PAD), jnp.float32),        # a1_t (target term + bias)
        pltpu.VMEM((TB, H, ACT_PAD), histories.dtype), # fused per-row weight W_b
        pltpu.VMEM((TB, H), jnp.float32),              # h accumulator
    ]

    # Advisory cost estimate for the XLA scheduler.
    flops = (2 * Bp * Sp * H * ACT_PAD                 # fused activation matmul
             + Bp * Sp * (4 * ACT_PAD + 2 * H)         # leaky + lane reduce + weighted sum
             + Bp * (2 * I * H + 4 * H * ACT_PAD + 4 * H * H))
    bytes_accessed = (histories.size * itemsize + tgt2d.size * 4
                      + Bp * H * 4 + weight_bytes)
    cost = pl.CostEstimate(flops=int(flops), transcendentals=0,
                           bytes_accessed=int(bytes_accessed))

    vmem_limit = int(min(max(int(1.25 * est(TB, TS)), 16 << 20), vmem_cap))

    out = pl.pallas_call(
        din_kernel,
        out_shape=jax.ShapeDtypeStruct((Bp, H), jnp.float32),
        grid_spec=pltpu.PrefetchScalarGridSpec(
            num_scalar_prefetch=0,
            grid=(nb, ns),
            in_specs=in_specs,
            out_specs=out_spec,
            scratch_shapes=scratch_shapes,
        ),
        compiler_params=pltpu.CompilerParams(
            dimension_semantics=("parallel", "arbitrary"),
            vmem_limit_bytes=vmem_limit,
        ),
        cost_estimate=cost,
    )(tgt2d, histories, *(prep[n] for n in _WEIGHT_NAMES))
    return out[:B]


def din_reference(target, histories, params):
    """Pure-JAX reference mirroring the PyTorch forward exactly (f32)."""
    w1, b1, w2, b2, wa1, ba1, wa2, ba2 = (params[k] for k in
                                          ("w1", "b1", "w2", "b2", "wa1", "ba1", "wa2", "ba2"))
    t = target @ w1.T + b1                                       # (B, 1, H)
    t = jnp.broadcast_to(t, histories.shape)                     # expand_as
    feat = jnp.concatenate([histories, t, histories * t], -1)    # (B, S, 3H)
    a = feat @ wa1.T + ba1
    a = jnp.where(a > 0, a, 0.01 * a)                            # LeakyReLU
    aw = a @ wa2.T + ba2                                         # (B, S, 1)
    h = jnp.sum(histories * aw, axis=1)                          # (B, H)
    return jnp.concatenate([h, t[:, 0]], -1) @ w2.T + b2


def init_params(key, input_size, hidden_size):
    """Deterministic init matching the PyTorch layer shapes (uniform +-1/sqrt(fan_in))."""
    ks = jax.random.split(key, 8)

    def lin(kw, kb, fan_out, fan_in):
        bound = 1.0 / jnp.sqrt(fan_in)
        w = jax.random.uniform(kw, (fan_out, fan_in), jnp.float32, -bound, bound)
        b = jax.random.uniform(kb, (fan_out,), jnp.float32, -bound, bound)
        return w, b

    w1, b1 = lin(ks[0], ks[1], hidden_size, input_size)          # ln1
    w2, b2 = lin(ks[2], ks[3], hidden_size, 2 * hidden_size)     # ln2
    wa1, ba1 = lin(ks[4], ks[5], ACT_DIM, 3 * hidden_size)       # activation_layer[0]
    wa2, ba2 = lin(ks[6], ks[7], 1, ACT_DIM)                     # activation_layer[3]
    return dict(w1=w1, b1=b1, w2=w2, b2=b2, wa1=wa1, ba1=ba1, wa2=wa2, ba2=ba2)


if __name__ == "__main__":
    key = jax.random.PRNGKey(0)

    # --- test 1: small canonical shapes, f32 path, single grid step --------------
    B, S, INPUT, HIDDEN = 2, 8, 16, 32
    k_t, k_h, k_p = jax.random.split(key, 3)
    target = jax.random.normal(k_t, (B, 1, INPUT), jnp.float32)
    histories = jax.random.normal(k_h, (B, S, HIDDEN), jnp.float32)
    params = init_params(k_p, INPUT, HIDDEN)
    prep = prepare_params(params)

    out = jax.block_until_ready(din_forward(target, histories, prep,
                                            hist_dtype=jnp.float32))
    ref = din_reference(target, histories, params)
    assert out.shape == (B, HIDDEN)
    assert jnp.allclose(out, ref, atol=1e-4, rtol=1e-4), "mismatch vs JAX reference (test 1)"

    # --- test 2a: exercises the 2-D grid (2 batch tiles x 3 seq tiles) + S padding,
    #              f32 path so the check stays tight ------------------------------
    B2, S2 = 32, 72
    k_t2, k_h2 = jax.random.split(jax.random.PRNGKey(1), 2)
    target2 = jax.random.normal(k_t2, (B2, 1, INPUT), jnp.float32)
    histories2 = jax.random.normal(k_h2, (B2, S2, HIDDEN), jnp.float32)
    ref2 = din_reference(target2, histories2, params)

    out2a = jax.block_until_ready(
        din_forward(target2, histories2, prep, batch_tile=16, seq_chunk=32,
                    hist_dtype=jnp.float32))
    assert out2a.shape == (B2, HIDDEN)
    assert jnp.allclose(out2a, ref2, atol=1e-4, rtol=1e-4), "mismatch vs JAX reference (test 2a)"

    # --- test 2b: same shapes, default bf16 history path (looser tolerance) ------
    out2b = jax.block_until_ready(
        din_forward(target2, histories2, prep, batch_tile=16, seq_chunk=32))
    assert out2b.shape == (B2, HIDDEN)
    assert jnp.allclose(out2b, ref2, atol=1e-1, rtol=1e-1), "mismatch vs JAX reference (test 2b)"

    print("KERNEL_OK")
</pallas_src>

<mosaic_0001>
module attributes {stable_mosaic.version = 11 : i64} {
  func.func @din_kernel(%arg0: i32, %arg1: i32, %arg2: memref<2x16xf32, #tpu.memory_space<vmem>>, %arg3: memref<2x8x32xf32, #tpu.memory_space<vmem>>, %arg4: memref<16x32xf32, #tpu.memory_space<vmem>>, %arg5: memref<1x32xf32, #tpu.memory_space<vmem>>, %arg6: memref<32x128xf32, #tpu.memory_space<vmem>>, %arg7: memref<32x128xf32, #tpu.memory_space<vmem>>, %arg8: memref<32x128xf32, #tpu.memory_space<vmem>>, %arg9: memref<1x128xf32, #tpu.memory_space<vmem>>, %arg10: memref<1x128xf32, #tpu.memory_space<vmem>>, %arg11: memref<1x1xf32, #tpu.memory_space<vmem>>, %arg12: memref<32x32xf32, #tpu.memory_space<vmem>>, %arg13: memref<32x32xf32, #tpu.memory_space<vmem>>, %arg14: memref<1x32xf32, #tpu.memory_space<vmem>>, %arg15: memref<2x32xf32, #tpu.memory_space<vmem>>, %arg16: memref<2x32xf32, #tpu.memory_space<vmem>>, %arg17: memref<2x128xf32, #tpu.memory_space<vmem>>, %arg18: memref<2x32x128xf32, #tpu.memory_space<vmem>>, %arg19: memref<2x32xf32, #tpu.memory_space<vmem>>) attributes {dimension_semantics = [#tpu.dimension_semantics<parallel>, #tpu.dimension_semantics<arbitrary>], iteration_bounds = array<i64: 1, 1>, scalar_prefetch = 0 : i64, scratch_operands = 4 : i64, tpu.core_type = #tpu.core_type<tc>, window_params = [{transform_indices = @transform_0, window_bounds = array<i64: 2, 16>}, {transform_indices = @transform_1, window_bounds = array<i64: 2, 8, 32>}, {pipeline_mode = #tpu.pipeline_mode<synchronous>, transform_indices = @transform_2, window_bounds = array<i64: 16, 32>}, {pipeline_mode = #tpu.pipeline_mode<synchronous>, transform_indices = @transform_3, window_bounds = array<i64: 1, 32>}, {pipeline_mode = #tpu.pipeline_mode<synchronous>, transform_indices = @transform_4, window_bounds = array<i64: 32, 128>}, {pipeline_mode = #tpu.pipeline_mode<synchronous>, transform_indices = @transform_5, window_bounds = array<i64: 32, 128>}, {pipeline_mode = #tpu.pipeline_mode<synchronous>, transform_indices = @transform_6, window_bounds = array<i64: 32, 128>}, {pipeline_mode = #tpu.pipeline_mode<synchronous>, transform_indices = @transform_7, window_bounds = array<i64: 1, 128>}, {pipeline_mode = #tpu.pipeline_mode<synchronous>, transform_indices = @transform_8, window_bounds = array<i64: 1, 128>}, {pipeline_mode = #tpu.pipeline_mode<synchronous>, transform_indices = @transform_9, window_bounds = array<i64: 1, 1>}, {pipeline_mode = #tpu.pipeline_mode<synchronous>, transform_indices = @transform_10, window_bounds = array<i64: 32, 32>}, {pipeline_mode = #tpu.pipeline_mode<synchronous>, transform_indices = @transform_11, window_bounds = array<i64: 32, 32>}, {pipeline_mode = #tpu.pipeline_mode<synchronous>, transform_indices = @transform_12, window_bounds = array<i64: 1, 32>}, {transform_indices = @transform_13, window_bounds = array<i64: 2, 32>}]} {
    %c0_i32 = arith.constant 0 : i32
    %0 = arith.cmpi eq, %arg1, %c0_i32 : i32
    %1 = arith.extui %0 : i1 to i32
    %c0_i32_0 = arith.constant 0 : i32
    %2 = arith.cmpi ne, %1, %c0_i32_0 : i32
    scf.if %2 {
      %c0_21 = arith.constant 0 : index
      %c0_22 = arith.constant 0 : index
      %32 = vector.load %arg2[%c0_21, %c0_22] : memref<2x16xf32, #tpu.memory_space<vmem>>, vector<2x16xf32>
      %c0_23 = arith.constant 0 : index
      %c0_24 = arith.constant 0 : index
      %33 = vector.load %arg4[%c0_23, %c0_24] : memref<16x32xf32, #tpu.memory_space<vmem>>, vector<16x32xf32>
      %cst_25 = arith.constant dense<0.000000e+00> : vector<2x32xf32>
      %34 = tpu.matmul %32, %33, %cst_25 {dimension_numbers = #tpu.dot_dimension_numbers<[1], [0], [0], [1], [0, 0, 1, 1], [], []>} : vector<2x16xf32>, vector<16x32xf32>, vector<2x32xf32> -> vector<2x32xf32>
      %c0_26 = arith.constant 0 : index
      %c0_27 = arith.constant 0 : index
      %35 = vector.load %arg5[%c0_26, %c0_27] : memref<1x32xf32, #tpu.memory_space<vmem>>, vector<1x32xf32>
      %36 = vector.broadcast %35 : vector<1x32xf32> to vector<2x32xf32>
      %37 = arith.addf %34, %36 : vector<2x32xf32>
      %c0_28 = arith.constant 0 : index
      %c0_29 = arith.constant 0 : index
      %38 = vector.load %arg16[%c0_28, %c0_29] : memref<2x32xf32, #tpu.memory_space<vmem>>, vector<2x32xf32>
      tpu.vector_store %arg16[%c0_28, %c0_29], %37 {strides = array<i32>} : memref<2x32xf32, #tpu.memory_space<vmem>>, vector<2x32xf32>,
      %c0_30 = arith.constant 0 : index
      %c0_31 = arith.constant 0 : index
      %39 = vector.load %arg6[%c0_30, %c0_31] : memref<32x128xf32, #tpu.memory_space<vmem>>, vector<32x128xf32>
      %cst_32 = arith.constant dense<0.000000e+00> : vector<2x128xf32>
      %40 = tpu.matmul %37, %39, %cst_32 {dimension_numbers = #tpu.dot_dimension_numbers<[1], [0], [0], [1], [0, 0, 1, 1], [], []>} : vector<2x32xf32>, vector<32x128xf32>, vector<2x128xf32> -> vector<2x128xf32>
      %c0_33 = arith.constant 0 : index
      %c0_34 = arith.constant 0 : index
      %41 = vector.load %arg9[%c0_33, %c0_34] : memref<1x128xf32, #tpu.memory_space<vmem>>, vector<1x128xf32>
      %42 = vector.broadcast %41 : vector<1x128xf32> to vector<2x128xf32>
      %43 = arith.addf %40, %42 : vector<2x128xf32>
      %c0_35 = arith.constant 0 : index
      %c0_36 = arith.constant 0 : index
      %44 = vector.load %arg17[%c0_35, %c0_36] : memref<2x128xf32, #tpu.memory_space<vmem>>, vector<2x128xf32>
      tpu.vector_store %arg17[%c0_35, %c0_36], %43 {strides = array<i32>} : memref<2x128xf32, #tpu.memory_space<vmem>>, vector<2x128xf32>,
      %c0_37 = arith.constant 0 : index
      %c0_38 = arith.constant 0 : index
      %45 = vector.load %arg7[%c0_37, %c0_38] : memref<32x128xf32, #tpu.memory_space<vmem>>, vector<32x128xf32>
      %46 = vector.shape_cast %45 : vector<32x128xf32> to vector<1x32x128xf32>
      %47 = vector.shape_cast %37 : vector<2x32xf32> to vector<2x32x1xf32>
      %c0_39 = arith.constant 0 : index
      %c0_40 = arith.constant 0 : index
      %48 = vector.load %arg8[%c0_39, %c0_40] : memref<32x128xf32, #tpu.memory_space<vmem>>, vector<32x128xf32>
      %49 = vector.shape_cast %48 : vector<32x128xf32> to vector<1x32x128xf32>
      %50 = vector.broadcast %47 : vector<2x32x1xf32> to vector<2x32x128xf32>
      %51 = vector.broadcast %49 : vector<1x32x128xf32> to vector<2x32x128xf32>
      %52 = arith.mulf %50, %51 : vector<2x32x128xf32>
      %53 = vector.broadcast %46 : vector<1x32x128xf32> to vector<2x32x128xf32>
      %54 = arith.addf %53, %52 : vector<2x32x128xf32>
      %c0_41 = arith.constant 0 : index
      %c0_42 = arith.constant 0 : index
      %c0_43 = arith.constant 0 : index
      %55 = vector.load %arg18[%c0_41, %c0_42, %c0_43] : memref<2x32x128xf32, #tpu.memory_space<vmem>>, vector<2x32x128xf32>
      tpu.vector_store %arg18[%c0_41, %c0_42, %c0_43], %54 {strides = array<i32>} : memref<2x32x128xf32, #tpu.memory_space<vmem>>, vector<2x32x128xf32>,
      %cst_44 = arith.constant 0.000000e+00 : f32
      %56 = vector.broadcast %cst_44 : f32 to vector<2x32xf32>
      %c0_45 = arith.constant 0 : index
      %c0_46 = arith.constant 0 : index
      %57 = vector.load %arg19[%c0_45, %c0_46] : memref<2x32xf32, #tpu.memory_space<vmem>>, vector<2x32xf32>
      tpu.vector_store %arg19[%c0_45, %c0_46], %56 {strides = array<i32>} : memref<2x32xf32, #tpu.memory_space<vmem>>, vector<2x32xf32>,
    } else {
    }
    %c0 = arith.constant 0 : index
    %c0_1 = arith.constant 0 : index
    %c0_2 = arith.constant 0 : index
    %3 = vector.load %arg3[%c0, %c0_1, %c0_2] : memref<2x8x32xf32, #tpu.memory_space<vmem>>, vector<2x8x32xf32>
    %c0_3 = arith.constant 0 : index
    %c0_4 = arith.constant 0 : index
    %c0_5 = arith.constant 0 : index
    %4 = vector.load %arg18[%c0_3, %c0_4, %c0_5] : memref<2x32x128xf32, #tpu.memory_space<vmem>>, vector<2x32x128xf32>
    "tpu.trace_start"() <{level = 10 : i32, message = "bsh,bhk->bsk"}> : () -> ()
    %cst = arith.constant dense<0.000000e+00> : vector<2x8x128xf32>
    %5 = tpu.matmul %3, %4, %cst {dimension_numbers = #tpu.dot_dimension_numbers<[2], [1], [1], [2], [0, 0, 0, 1, 1, 2], [0], [0]>} : vector<2x8x32xf32>, vector<2x32x128xf32>, vector<2x8x128xf32> -> vector<2x8x128xf32>
    "tpu.trace_stop"() : () -> ()
    %c0_6 = arith.constant 0 : index
    %c0_7 = arith.constant 0 : index
    %6 = vector.load %arg17[%c0_6, %c0_7] : memref<2x128xf32, #tpu.memory_space<vmem>>, vector<2x128xf32>
    %7 = vector.shape_cast %6 : vector<2x128xf32> to vector<2x1x128xf32>
    %8 = vector.broadcast %7 : vector<2x1x128xf32> to vector<2x8x128xf32>
    %9 = arith.addf %5, %8 : vector<2x8x128xf32>
    %cst_8 = arith.constant 0.00999999977 : f32
    %10 = vector.broadcast %cst_8 : f32 to vector<2x8x128xf32>
    %11 = arith.mulf %10, %9 : vector<2x8x128xf32>
    %12 = arith.maximumf %9, %11 : vector<2x8x128xf32>
    %c0_9 = arith.constant 0 : index
    %c0_10 = arith.constant 0 : index
    %13 = vector.load %arg10[%c0_9, %c0_10] : memref<1x128xf32, #tpu.memory_space<vmem>>, vector<1x128xf32>
    %14 = vector.shape_cast %13 : vector<1x128xf32> to vector<1x1x128xf32>
    %15 = vector.broadcast %14 : vector<1x1x128xf32> to vector<2x8x128xf32>
    %16 = arith.mulf %12, %15 : vector<2x8x128xf32>
    %cst_11 = arith.constant dense<0.000000e+00> : vector<2x8xf32>
    %17 = vector.multi_reduction <add>, %16, %cst_11 [2] : vector<2x8x128xf32> to vector<2x8xf32>
    %18 = vector.shape_cast %17 : vector<2x8xf32> to vector<2x8x1xf32>
    %c0_12 = arith.constant 0 : index
    %c0_13 = arith.constant 0 : index
    %19 = vector.load %arg11[%c0_12, %c0_13] : memref<1x1xf32, #tpu.memory_space<vmem>>, vector<1x1xf32>
    %20 = vector.shape_cast %19 : vector<1x1xf32> to vector<1x1x1xf32>
    %21 = vector.broadcast %20 : vector<1x1x1xf32> to vector<2x8x1xf32>
    %22 = arith.addf %18, %21 : vector<2x8x1xf32>
    %c0_14 = arith.constant 0 : index
    %c0_15 = arith.constant 0 : index
    %23 = vector.load %arg19[%c0_14, %c0_15] : memref<2x32xf32, #tpu.memory_space<vmem>>, vector<2x32xf32>
    %24 = vector.broadcast %22 : vector<2x8x1xf32> to vector<2x8x32xf32>
    %25 = arith.mulf %3, %24 : vector<2x8x32xf32>
    %cst_16 = arith.constant dense<0.000000e+00> : vector<2x32xf32>
    %26 = vector.multi_reduction <add>, %25, %cst_16 [1] : vector<2x8x32xf32> to vector<2x32xf32>
    %27 = arith.addf %23, %26 : vector<2x32xf32>
    %c0_17 = arith.constant 0 : index
    %c0_18 = arith.constant 0 : index
    %28 = vector.load %arg19[%c0_17, %c0_18] : memref<2x32xf32, #tpu.memory_space<vmem>>, vector<2x32xf32>
    tpu.vector_store %arg19[%c0_17, %c0_18], %27 {strides = array<i32>} : memref<2x32xf32, #tpu.memory_space<vmem>>, vector<2x32xf32>,
    %c0_i32_19 = arith.constant 0 : i32
    %29 = arith.cmpi eq, %arg1, %c0_i32_19 : i32
    %30 = arith.extui %29 : i1 to i32
    %c0_i32_20 = arith.constant 0 : i32
    %31 = arith.cmpi ne, %30, %c0_i32_20 : i32
    scf.if %31 {
      %c0_21 = arith.constant 0 : index
      %c0_22 = arith.constant 0 : index
      %32 = vector.load %arg19[%c0_21, %c0_22] : memref<2x32xf32, #tpu.memory_space<vmem>>, vector<2x32xf32>
      %c0_23 = arith.constant 0 : index
      %c0_24 = arith.constant 0 : index
      %33 = vector.load %arg12[%c0_23, %c0_24] : memref<32x32xf32, #tpu.memory_space<vmem>>, vector<32x32xf32>
      %cst_25 = arith.constant dense<0.000000e+00> : vector<2x32xf32>
      %34 = tpu.matmul %32, %33, %cst_25 {dimension_numbers = #tpu.dot_dimension_numbers<[1], [0], [0], [1], [0, 0, 1, 1], [], []>} : vector<2x32xf32>, vector<32x32xf32>, vector<2x32xf32> -> vector<2x32xf32>
      %c0_26 = arith.constant 0 : index
      %c0_27 = arith.constant 0 : index
      %35 = vector.load %arg16[%c0_26, %c0_27] : memref<2x32xf32, #tpu.memory_space<vmem>>, vector<2x32xf32>
      %c0_28 = arith.constant 0 : index
      %c0_29 = arith.constant 0 : index
      %36 = vector.load %arg13[%c0_28, %c0_29] : memref<32x32xf32, #tpu.memory_space<vmem>>, vector<32x32xf32>
      %cst_30 = arith.constant dense<0.000000e+00> : vector<2x32xf32>
      %37 = tpu.matmul %35, %36, %cst_30 {dimension_numbers = #tpu.dot_dimension_numbers<[1], [0], [0], [1], [0, 0, 1, 1], [], []>} : vector<2x32xf32>, vector<32x32xf32>, vector<2x32xf32> -> vector<2x32xf32>
      %38 = arith.addf %34, %37 : vector<2x32xf32>
      %c0_31 = arith.constant 0 : index
      %c0_32 = arith.constant 0 : index
      %39 = vector.load %arg14[%c0_31, %c0_32] : memref<1x32xf32, #tpu.memory_space<vmem>>, vector<1x32xf32>
      %40 = vector.broadcast %39 : vector<1x32xf32> to vector<2x32xf32>
      %41 = arith.addf %38, %40 : vector<2x32xf32>
      %c0_33 = arith.constant 0 : index
      %c0_34 = arith.constant 0 : index
      %42 = vector.load %arg15[%c0_33, %c0_34] : memref<2x32xf32, #tpu.memory_space<vmem>>, vector<2x32xf32>
      tpu.vector_store %arg15[%c0_33, %c0_34], %41 {strides = array<i32>} : memref<2x32xf32, #tpu.memory_space<vmem>>, vector<2x32xf32>,
    } else {
    }
    return
  }
  func.func @transform_0(%arg0: i32, %arg1: i32) -> (i32, i32) {
    %c0_i32 = arith.constant 0 : i32
    %c0_i32_0 = arith.constant 0 : i32
    return %arg0, %c0_i32 : i32, i32
  }
  func.func @transform_1(%arg0: i32, %arg1: i32) -> (i32, i32, i32) {
    %c0_i32 = arith.constant 0 : i32
    %c0_i32_0 = arith.constant 0 : i32
    return %arg0, %arg1, %c0_i32 : i32, i32, i32
  }
  func.func @transform_2(%arg0: i32, %arg1: i32) -> (i32, i32) {
    %c0_i32 = arith.constant 0 : i32
    %c0_i32_0 = arith.constant 0 : i32
    %c0_i32_1 = arith.constant 0 : i32
    return %c0_i32, %c0_i32_0 : i32, i32
  }
  func.func @transform_3(%arg0: i32, %arg1: i32) -> (i32, i32) {
    %c0_i32 = arith.constant 0 : i32
    %c0_i32_0 = arith.constant 0 : i32
    %c0_i32_1 = arith.constant 0 : i32
    return %c0_i32, %c0_i32_0 : i32, i32
  }
  func.func @transform_4(%arg0: i32, %arg1: i32) -> (i32, i32) {
    %c0_i32 = arith.constant 0 : i32
    %c0_i32_0 = arith.constant 0 : i32
    %c0_i32_1 = arith.constant 0 : i32
    return %c0_i32, %c0_i32_0 : i32, i32
  }
  func.func @transform_5(%arg0: i32, %arg1: i32) -> (i32, i32) {
    %c0_i32 = arith.constant 0 : i32
    %c0_i32_0 = arith.constant 0 : i32
    %c0_i32_1 = arith.constant 0 : i32
    return %c0_i32, %c0_i32_0 : i32, i32
  }
  func.func @transform_6(%arg0: i32, %arg1: i32) -> (i32, i32) {
    %c0_i32 = arith.constant 0 : i32
    %c0_i32_0 = arith.constant 0 : i32
    %c0_i32_1 = arith.constant 0 : i32
    return %c0_i32, %c0_i32_0 : i32, i32
  }
  func.func @transform_7(%arg0: i32, %arg1: i32) -> (i32, i32) {
    %c0_i32 = arith.constant 0 : i32
    %c0_i32_0 = arith.constant 0 : i32
    %c0_i32_1 = arith.constant 0 : i32
    return %c0_i32, %c0_i32_0 : i32, i32
  }
  func.func @transform_8(%arg0: i32, %arg1: i32) -> (i32, i32) {
    %c0_i32 = arith.constant 0 : i32
    %c0_i32_0 = arith.constant 0 : i32
    %c0_i32_1 = arith.constant 0 : i32
    return %c0_i32, %c0_i32_0 : i32, i32
  }
  func.func @transform_9(%arg0: i32, %arg1: i32) -> (i32, i32) {
    %c0_i32 = arith.constant 0 : i32
    %c0_i32_0 = arith.constant 0 : i32
    %c0_i32_1 = arith.constant 0 : i32
    return %c0_i32, %c0_i32_0 : i32, i32
  }
  func.func @transform_10(%arg0: i32, %arg1: i32) -> (i32, i32) {
    %c0_i32 = arith.constant 0 : i32
    %c0_i32_0 = arith.constant 0 : i32
    %c0_i32_1 = arith.constant 0 : i32
    return %c0_i32, %c0_i32_0 : i32, i32
  }
  func.func @transform_11(%arg0: i32, %arg1: i32) -> (i32, i32) {
    %c0_i32 = arith.constant 0 : i32
    %c0_i32_0 = arith.constant 0 : i32
    %c0_i32_1 = arith.constant 0 : i32
    return %c0_i32, %c0_i32_0 : i32, i32
  }
  func.func @transform_12(%arg0: i32, %arg1: i32) -> (i32, i32) {
    %c0_i32 = arith.constant 0 : i32
    %c0_i32_0 = arith.constant 0 : i32
    %c0_i32_1 = arith.constant 0 : i32
    return %c0_i32, %c0_i32_0 : i32, i32
  }
  func.func @transform_13(%arg0: i32, %arg1: i32) -> (i32, i32) {
    %c0_i32 = arith.constant 0 : i32
    %c0_i32_0 = arith.constant 0 : i32
    return %arg0, %c0_i32 : i32, i32
  }
}

</mosaic_0001>

<llo_original>
// kernel: tpu_custom_call.1
$region0: #{tpu_custom_call.1}
  #allocation0 [shape = 'u32[]', space=smem, size = 0x4, offset = 0x4, fixed_abs, tag = 'smem constant byte address 0x4 - core index']
  #allocation1 [shape = 'u32[144,128]{1,0:T(1,128)}', space=vmem, size = 0x12000, scoped, tag = 'internal scratch']
  #allocation2 [shape = 'f32[2,32]{1,0:T(2,128)}', space=vmem, size = 0x400, scoped, tag = 'scratch operand']
  #allocation3 [shape = 'f32[2,128]{1,0:T(2,128)}', space=vmem, size = 0x400, scoped, tag = 'scratch operand']
  #allocation4 [shape = 'f32[2,32,128]{2,1,0:T(8,128)}', space=vmem, size = 0x8000, scoped, tag = 'scratch operand']
  #allocation5 [shape = 'f32[2,32]{1,0:T(2,128)}', space=vmem, size = 0x400, scoped, tag = 'scratch operand']
  #allocation6 [shape = 'f32[1,1]{1,0:T(1,128)S(1)}', space=vmem, size = 0x200, scoped, tag = 'scoped memory for tpu_custom_call.1']
  %s0 = inlined_call_operand.vmem [shape: f32[2,16], index: 0, kind: input, shape index: {}]
  %s1 = inlined_call_operand.hbm [shape: f32[2,8,32], index: 1, kind: input, shape index: {}]
  %s2 = inlined_call_operand.hbm [shape: f32[16,32], index: 2, kind: input, shape index: {}]
  %s3 = inlined_call_operand.vmem [shape: f32[1,32], index: 3, kind: input, shape index: {}]
  %s4 = inlined_call_operand.hbm [shape: f32[32,128], index: 4, kind: input, shape index: {}]
  %s5 = inlined_call_operand.hbm [shape: f32[32,128], index: 5, kind: input, shape index: {}]
  %s6 = inlined_call_operand.hbm [shape: f32[32,128], index: 6, kind: input, shape index: {}]
  %s7 = inlined_call_operand.vmem [shape: f32[1,128], index: 7, kind: input, shape index: {}]
  %s8 = inlined_call_operand.vmem [shape: f32[1,128], index: 8, kind: input, shape index: {}]
  %s9 = inlined_call_operand.<no memory space> [shape: f32[1,1], index: 9, kind: input, shape index: {}]
  %s10 = inlined_call_operand.vmem [shape: f32[32,32], index: 10, kind: input, shape index: {}]
  %s11 = inlined_call_operand.hbm [shape: f32[32,32], index: 11, kind: input, shape index: {}]
  %s12 = inlined_call_operand.vmem [shape: f32[1,32], index: 12, kind: input, shape index: {}]
  %s13 = inlined_call_operand.hbm [shape: f32[2,32], index: 13, kind: output, shape index: {}]
  %s14 = sld [smem:[#allocation0]]
  $region94: #{tpu_custom_call.1} parent=0
    _
  %s16 = ssub.s32 1, %s14
  %s17 = scalar_select 0, %s16, %s14
  %v18 = vstv %s9
  %19 = vst [vmem:[#allocation6] sm:$0x1] %v18
  $region1: #{tpu_custom_call.1} parent=0
    #allocation7 [shape = 'u8[8192]{0}', space=vmem, size = 0x2000, scoped, tag = 'input window, operand 1, single buffered']
    #allocation8 [shape = 's32[1]{0}', space=sflag, size = 0x4, scoped, tag = 'scoped memory for tpu_custom_call.1']
    #allocation9 [shape = 's32[1]{0}', space=sflag, size = 0x4, scoped, tag = 'scoped memory for tpu_custom_call.1']
    #allocation10 [shape = 'u8[8192]{0}', space=vmem, size = 0x2000, scoped, tag = 'input window, operand 2, single buffered']
    #allocation11 [shape = 's32[1]{0}', space=sflag, size = 0x4, scoped, tag = 'scoped memory for tpu_custom_call.1']
    #allocation12 [shape = 'u8[16384]{0}', space=vmem, size = 0x4000, scoped, tag = 'input window, operand 4, single buffered']
    #allocation13 [shape = 'u8[16384]{0}', space=vmem, size = 0x4000, scoped, tag = 'input window, operand 5, single buffered']
    #allocation14 [shape = 's32[1]{0}', space=sflag, size = 0x4, scoped, tag = 'scoped memory for tpu_custom_call.1']
    #allocation15 [shape = 'u8[16384]{0}', space=vmem, size = 0x4000, scoped, tag = 'input window, operand 6, single buffered']
    #allocation16 [shape = 'u8[16384]{0}', space=vmem, size = 0x4000, scoped, tag = 'input window, operand 11, single buffered']
    #allocation17 [shape = 's32[1]{0}', space=sflag, size = 0x4, scoped, tag = 'scoped memory for tpu_custom_call.1']
    #allocation18 [shape = 'u8[1024]{0}', space=vmem, size = 0x400, scoped, tag = 'output window, operand 0, single buffered']
    %20 = vsyncpa [#allocation8], 0
    %21 = vsyncpa [#allocation11], 0
    %22 = vsyncpa [#allocation14], 0
    %23 = vsyncpa [#allocation17], 0
    %24 = vsyncpa [#allocation9], 0
    // Predicated region
    $region2: #{tpu_custom_call.1} parent=1 // pred_check
      _
    $region3: #{tpu_custom_call.1} parent=1 // pred_check_branch
      %26 = sbr.rel (0) target = $region5
    $region4: #{tpu_custom_call.1} parent=1 // pred_region
      _
    $region5: #{tpu_custom_call.1} parent=1 // pred_fallthru
      _
    // Predicated region
    $region6: #{tpu_custom_call.1} parent=1 // pred_check
      _
    $region7: #{tpu_custom_call.1} parent=1 // pred_check_branch
      %28 = sbr.rel (0) target = $region9
    $region8: #{tpu_custom_call.1} parent=1 // pred_region
      %s30 = ssub.s32 256, 256
      %31 = vsyncadd [#allocation8], %s30
      %s32 = sshll.u32 [#allocation7], 4
      %s33 = int_to_ptr.vmem [resolvable:$true] %s32
      %38 = dma.hbm_to_vmem [thread:$0]  %s1, 256, %s33, [#allocation8], 128, 128, 8
    $region9: #{tpu_custom_call.1} parent=1 // pred_fallthru
      _
    // Predicated region
    $region10: #{tpu_custom_call.1} parent=1 // pred_check
      _
    $region11: #{tpu_custom_call.1} parent=1 // pred_check_branch
      %40 = sbr.rel (0) target = $region13
    $region12: #{tpu_custom_call.1} parent=1 // pred_region
      %s42 = ssub.s32 256, 256
      %43 = vsyncadd [#allocation11], %s42
      %s44 = sshll.u32 [#allocation10], 4
      %s45 = int_to_ptr.vmem [resolvable:$true] %s44
      %50 = dma.hbm_to_vmem [thread:$0]  %s2, 256, %s45, [#allocation11], 128, 128, 8
    $region13: #{tpu_custom_call.1} parent=1 // pred_fallthru
      _
    // Predicated region
    $region14: #{tpu_custom_call.1} parent=1 // pred_check
      _
    $region15: #{tpu_custom_call.1} parent=1 // pred_check_branch
      %52 = sbr.rel (0) target = $region17
    $region16: #{tpu_custom_call.1} parent=1 // pred_region
      _
    $region17: #{tpu_custom_call.1} parent=1 // pred_fallthru
      _
    // Predicated region
    $region18: #{tpu_custom_call.1} parent=1 // pred_check
      _
    $region19: #{tpu_custom_call.1} parent=1 // pred_check_branch
      %54 = sbr.rel (0) target = $region21
    $region20: #{tpu_custom_call.1} parent=1 // pred_region
      %s56 = ssub.s32 512, 512
      %57 = vsyncadd [#allocation11], %s56
      %s58 = sshll.u32 [#allocation12], 4
      %s59 = int_to_ptr.vmem [resolvable:$true] %s58
      %64 = dma.hbm_to_vmem [thread:$0]  %s4, 512, %s59, [#allocation11], 128, 128, 8
    $region21: #{tpu_custom_call.1} parent=1 // pred_fallthru
      _
    // Predicated region
    $region22: #{tpu_custom_call.1} parent=1 // pred_check
      _
    $region23: #{tpu_custom_call.1} parent=1 // pred_check_branch
      %66 = sbr.rel (0) target = $region25
    $region24: #{tpu_custom_call.1} parent=1 // pred_region
      %s68 = ssub.s32 512, 512
      %69 = vsyncadd [#allocation14], %s68
      %s70 = sshll.u32 [#allocation13], 4
      %s71 = int_to_ptr.vmem [resolvable:$true] %s70
      %76 = dma.hbm_to_vmem [thread:$0]  %s5, 512, %s71, [#allocation14], 128, 128, 8
    $region25: #{tpu_custom_call.1} parent=1 // pred_fallthru
      _
    // Predicated region
    $region26: #{tpu_custom_call.1} parent=1 // pred_check
      _
    $region27: #{tpu_custom_call.1} parent=1 // pred_check_branch
      %78 = sbr.rel (0) target = $region29
    $region28: #{tpu_custom_call.1} parent=1 // pred_region
      %s80 = ssub.s32 512, 512
      %81 = vsyncadd [#allocation14], %s80
      %s82 = sshll.u32 [#allocation15], 4
      %s83 = int_to_ptr.vmem [resolvable:$true] %s82
      %88 = dma.hbm_to_vmem [thread:$0]  %s6, 512, %s83, [#allocation14], 128, 128, 8
    $region29: #{tpu_custom_call.1} parent=1 // pred_fallthru
      _
    // Predicated region
    $region30: #{tpu_custom_call.1} parent=1 // pred_check
      _
    $region31: #{tpu_custom_call.1} parent=1 // pred_check_branch
      %90 = sbr.rel (0) target = $region33
    $region32: #{tpu_custom_call.1} parent=1 // pred_region
      _
    $region33: #{tpu_custom_call.1} parent=1 // pred_fallthru
      _
    // Predicated region
    $region34: #{tpu_custom_call.1} parent=1 // pred_check
      _
    $region35: #{tpu_custom_call.1} parent=1 // pred_check_branch
      %92 = sbr.rel (0) target = $region37
    $region36: #{tpu_custom_call.1} parent=1 // pred_region
      _
    $region37: #{tpu_custom_call.1} parent=1 // pred_fallthru
      _
    // Predicated region
    $region38: #{tpu_custom_call.1} parent=1 // pred_check
      _
    $region39: #{tpu_custom_call.1} parent=1 // pred_check_branch
      %94 = sbr.rel (0) target = $region41
    $region40: #{tpu_custom_call.1} parent=1 // pred_region
      _
    $region41: #{tpu_custom_call.1} parent=1 // pred_fallthru
      _
    // Predicated region
    $region42: #{tpu_custom_call.1} parent=1 // pred_check
      _
    $region43: #{tpu_custom_call.1} parent=1 // pred_check_branch
      %96 = sbr.rel (0) target = $region45
    $region44: #{tpu_custom_call.1} parent=1 // pred_region
      _
    $region45: #{tpu_custom_call.1} parent=1 // pred_fallthru
      _
    // Predicated region
    $region46: #{tpu_custom_call.1} parent=1 // pred_check
      _
    $region47: #{tpu_custom_call.1} parent=1 // pred_check_branch
      %98 = sbr.rel (0) target = $region49
    $region48: #{tpu_custom_call.1} parent=1 // pred_region
      %s100 = ssub.s32 512, 512
      %101 = vsyncadd [#allocation17], %s100
      %s102 = sshll.u32 [#allocation16], 4
      %s103 = int_to_ptr.vmem [resolvable:$true] %s102
      %108 = dma.hbm_to_vmem [thread:$0]  %s11, 512, %s103, [#allocation17], 128, 128, 8
    $region49: #{tpu_custom_call.1} parent=1 // pred_fallthru
      _
    // Predicated region
    $region50: #{tpu_custom_call.1} parent=1 // pred_check
      _
    $region51: #{tpu_custom_call.1} parent=1 // pred_check_branch
      %110 = sbr.rel (0) target = $region53
    $region52: #{tpu_custom_call.1} parent=1 // pred_region
      _
    $region53: #{tpu_custom_call.1} parent=1 // pred_fallthru
      _
    // Predicated region
    $region54: #{tpu_custom_call.1} parent=1 // pred_check
      _
    $region55: #{tpu_custom_call.1} parent=1 // pred_check_branch
      %112 = sbr.rel (0) target = $region57
    $region56: #{tpu_custom_call.1} parent=1 // pred_region
      %113 = dma.done [#allocation8], 256
    $region57: #{tpu_custom_call.1} parent=1 // pred_fallthru
      _
    // Predicated region
    $region58: #{tpu_custom_call.1} parent=1 // pred_check
      _
    $region59: #{tpu_custom_call.1} parent=1 // pred_check_branch
      %115 = sbr.rel (0) target = $region61
    $region60: #{tpu_custom_call.1} parent=1 // pred_region
      %116 = dma.done [#allocation11], 256
    $region61: #{tpu_custom_call.1} parent=1 // pred_fallthru
      _
    // Predicated region
    $region62: #{tpu_custom_call.1} parent=1 // pred_check
      _
    $region63: #{tpu_custom_call.1} parent=1 // pred_check_branch
      %118 = sbr.rel (0) target = $region65
    $region64: #{tpu_custom_call.1} parent=1 // pred_region
      %119 = dma.done [#allocation11], 512
    $region65: #{tpu_custom_call.1} parent=1 // pred_fallthru
      _
    // Predicated region
    $region66: #{tpu_custom_call.1} parent=1 // pred_check
      _
    $region67: #{tpu_custom_call.1} parent=1 // pred_check_branch
      %121 = sbr.rel (0) target = $region69
    $region68: #{tpu_custom_call.1} parent=1 // pred_region
      %122 = dma.done [#allocation14], 512
    $region69: #{tpu_custom_call.1} parent=1 // pred_fallthru
      _
    // Predicated region
    $region70: #{tpu_custom_call.1} parent=1 // pred_check
      _
    $region71: #{tpu_custom_call.1} parent=1 // pred_check_branch
      %124 = sbr.rel (0) target = $region73
    $region72: #{tpu_custom_call.1} parent=1 // pred_region
      %125 = dma.done [#allocation14], 512
    $region73: #{tpu_custom_call.1} parent=1 // pred_fallthru
      _
    // Predicated region
    $region74: #{tpu_custom_call.1} parent=1 // pred_check
      _
    $region75: #{tpu_custom_call.1} parent=1 // pred_check_branch
      %127 = sbr.rel (0) target = $region77
    $region76: #{tpu_custom_call.1} parent=1 // pred_region
      %128 = dma.done [#allocation17], 512
    $region77: #{tpu_custom_call.1} parent=1 // pred_fallthru
      _
    %p129 = scmp.eq.s32.totalorder 0, 0
    // Predicated region
    $region78: #{tpu_custom_call.1} parent=1 // pred_check
      %p130 = pneg %p129
    $region79: #{tpu_custom_call.1} parent=1 // pred_check_branch
      %132 = sbr.rel (%p130) target = $region81
    $region80: #{tpu_custom_call.1} parent=1 // pred_region
      %v133 = vld [vmem:[%s0] sm:$0x3]
      %v134 = vld [vmem:[#allocation10] sm:$0xff]
      %v135 = vld [vmem:[#allocation10 + $0x8] sm:$0xff]
      %v136 = vld [vmem:[%s3] sm:$0x1]
      %v138 = vlaneseq
      %v139 = vshrl.u32 %v138, 7
      %v140 = vsub.s32 0, %v139
      %v141 = vrot.slane %v136, %v140
      %vm143 = vcmask 130048
      %v145 = vsel %vm143, %v133, 0
      %147 = vmatprep.subr.mxu0 0.0
      %148 = vmatpush1.msra.mxu0 %v134
      %149 = vmatprep.subr.mxu0 0.0
      %150 = vmatpush1.msra.mxu0 %v135
      %151 = vmatprep.subr.mxu0 0.0
      %152 = vmatpush1.msra.mxu0 0.0
      %153 = vmatprep.subr.mxu0 0.0
      %154 = vmatpush1.msra.mxu0 0.0
      %155 = vmatprep.subr.mxu0 0.0
      %156 = vmatpush1.msra.mxu0 0.0
      %157 = vmatprep.subr.mxu0 0.0
      %158 = vmatpush1.msra.mxu0 0.0
      %159 = vmatprep.subr.mxu0 0.0
      %160 = vmatpush1.msra.mxu0 0.0
      %161 = vmatprep.subr.mxu0 0.0
      %162 = vmatpush1.msra.mxu0 0.0
      %163 = vmatprep.subr.mxu0 0.0
      %164 = vmatpush1.msra.mxu0 0.0
      %165 = vmatprep.subr.mxu0 0.0
      %166 = vmatpush1.msra.mxu0 0.0
      %167 = vmatprep.subr.mxu0 0.0
      %168 = vmatpush1.msra.mxu0 0.0
      %169 = vmatprep.subr.mxu0 0.0
      %170 = vmatpush1.msra.mxu0 0.0
      %171 = vmatprep.subr.mxu0 0.0
      %172 = vmatpush1.msra.mxu0 0.0
      %173 = vmatprep.subr.mxu0 0.0
      %174 = vmatpush1.msra.mxu0 0.0
      %175 = vmatprep.subr.mxu0 0.0
      %176 = vmatpush1.msra.mxu0 0.0
      %177 = vmatprep.subr.mxu0 0.0
      %178 = vmatpush1.msra.mxu0 0.0
      %179 = vmatprep.subr.mxu0 0.0
      %180 = vmatpush1.msra.mxu0 0.0
      %181 = vmatprep.subr.mxu0 0.0
      %182 = vmatpush1.msra.mxu0 0.0
      %183 = vmatprep.subr.mxu0 0.0
      %184 = vmatpush1.msra.mxu0 0.0
      %185 = vmatprep.subr.mxu0 0.0
      %186 = vmatpush1.msra.mxu0 0.0
      %187 = vmatprep.subr.mxu0 0.0
      %188 = vmatpush1.msra.mxu0 0.0
      %189 = vmatprep.subr.mxu0 0.0
      %190 = vmatpush1.msra.mxu0 0.0
      %191 = vmatprep.subr.mxu0 0.0
      %192 = vmatpush1.msra.mxu0 0.0
      %193 = vmatprep.subr.mxu0 0.0
      %194 = vmatpush1.msra.mxu0 0.0
      %195 = vmatprep.subr.mxu0 0.0
      %196 = vmatpush1.msra.mxu0 0.0
      %197 = vmatprep.subr.mxu0 0.0
      %198 = vmatpush1.msra.mxu0 0.0
      %199 = vmatprep.subr.mxu0 0.0
      %200 = vmatpush1.msra.mxu0 0.0
      %201 = vmatprep.subr.mxu0 0.0
      %202 = vmatpush1.msra.mxu0 0.0
      %203 = vmatprep.subr.mxu0 0.0
      %204 = vmatpush1.msra.mxu0 0.0
      %205 = vmatprep.subr.mxu0 0.0
      %206 = vmatpush1.msra.mxu0 0.0
      %207 = vmatprep.subr.mxu0 0.0
      %208 = vmatpush1.msra.mxu0 0.0
      %209 = vmatprep.subr.mxu0 0.0
      %210 = vmatpush1.msra.mxu0 0.0
      %211 = vmatprep.mubr.f32.mxu0 0.0
      %212 = vmatmul.mubr.f32.gmra.mrb[0].mxu0 %v145
      %v213 = vpop.f32.mrb[0].mxu0
      %v214 = vadd.f32 %v141, %v213
      %v215 = vpop.f32.mrb[0].mxu0
      %216 = vdwg.mxu0
      %vm217 = vcmask 254976
      %218 = vst.msk [vmem:[#allocation2] sm:$0x3] %vm217, %v214
      %v219 = vld [vmem:[#allocation12] sm:$0xff]
      %v220 = vld [vmem:[#allocation12 + $0x8] sm:$0xff]
      %v221 = vld [vmem:[#allocation12 + $0x10] sm:$0xff]
      %v222 = vld [vmem:[#allocation12 + $0x18] sm:$0xff]
      %v223 = vld [vmem:[%s7] sm:$0x1]
      %v225 = vlaneseq
      %v226 = vshrl.u32 %v225, 7
      %v227 = vsub.s32 0, %v226
      %v228 = vrot.slane %v223, %v227
      %vm230 = vcmask 261120
      %v232 = vsel %vm230, %v214, 0
      %234 = vmatprep.subr.mxu0 0.0
      %235 = vmatpush1.msra.mxu0 %v219
      %236 = vmatprep.subr.mxu0 0.0
      %237 = vmatpush1.msra.mxu0 %v220
      %238 = vmatprep.subr.mxu0 0.0
      %239 = vmatpush1.msra.mxu0 %v221
      %240 = vmatprep.subr.mxu0 0.0
      %241 = vmatpush1.msra.mxu0 %v222
      %242 = vmatprep.subr.mxu0 0.0
      %243 = vmatpush1.msra.mxu0 0.0
      %244 = vmatprep.subr.mxu0 0.0
      %245 = vmatpush1.msra.mxu0 0.0
      %246 = vmatprep.subr.mxu0 0.0
      %247 = vmatpush1.msra.mxu0 0.0
      %248 = vmatprep.subr.mxu0 0.0
      %249 = vmatpush1.msra.mxu0 0.0
      %250 = vmatprep.subr.mxu0 0.0
      %251 = vmatpush1.msra.mxu0 0.0
      %252 = vmatprep.subr.mxu0 0.0
      %253 = vmatpush1.msra.mxu0 0.0
      %254 = vmatprep.subr.mxu0 0.0
      %255 = vmatpush1.msra.mxu0 0.0
      %256 = vmatprep.subr.mxu0 0.0
      %257 = vmatpush1.msra.mxu0 0.0
      %258 = vmatprep.subr.mxu0 0.0
      %259 = vmatpush1.msra.mxu0 0.0
      %260 = vmatprep.subr.mxu0 0.0
      %261 = vmatpush1.msra.mxu0 0.0
      %262 = vmatprep.subr.mxu0 0.0
      %263 = vmatpush1.msra.mxu0 0.0
      %264 = vmatprep.subr.mxu0 0.0
      %265 = vmatpush1.msra.mxu0 0.0
      %266 = vmatprep.subr.mxu0 0.0
      %267 = vmatpush1.msra.mxu0 0.0
      %268 = vmatprep.subr.mxu0 0.0
      %269 = vmatpush1.msra.mxu0 0.0
      %270 = vmatprep.subr.mxu0 0.0
      %271 = vmatpush1.msra.mxu0 0.0
      %272 = vmatprep.subr.mxu0 0.0
      %273 = vmatpush1.msra.mxu0 0.0
      %274 = vmatprep.subr.mxu0 0.0
      %275 = vmatpush1.msra.mxu0 0.0
      %276 = vmatprep.subr.mxu0 0.0
      %277 = vmatpush1.msra.mxu0 0.0
      %278 = vmatprep.subr.mxu0 0.0
      %279 = vmatpush1.msra.mxu0 0.0
      %280 = vmatprep.subr.mxu0 0.0
      %281 = vmatpush1.msra.mxu0 0.0
      %282 = vmatprep.subr.mxu0 0.0
      %283 = vmatpush1.msra.mxu0 0.0
      %284 = vmatprep.subr.mxu0 0.0
      %285 = vmatpush1.msra.mxu0 0.0
      %286 = vmatprep.subr.mxu0 0.0
      %287 = vmatpush1.msra.mxu0 0.0
      %288 = vmatprep.subr.mxu0 0.0
      %289 = vmatpush1.msra.mxu0 0.0
      %290 = vmatprep.subr.mxu0 0.0
      %291 = vmatpush1.msra.mxu0 0.0
      %292 = vmatprep.subr.mxu0 0.0
      %293 = vmatpush1.msra.mxu0 0.0
      %294 = vmatprep.subr.mxu0 0.0
      %295 = vmatpush1.msra.mxu0 0.0
      %296 = vmatprep.subr.mxu0 0.0
      %297 = vmatpush1.msra.mxu0 0.0
      %298 = vmatprep.mubr.f32.mxu0 0.0
      %299 = vmatmul.mubr.f32.gmra.mrb[0].mxu0 %v232
      %v300 = vpop.f32.mrb[0].mxu0
      %v301 = vadd.f32 %v228, %v300
      %v302 = vpop.f32.mrb[0].mxu0
      %303 = vdwg.mxu0
      %304 = vst [vmem:[#allocation3] sm:$0x3] %v301
      %v305 = vld [vmem:[#allocation13] sm:$0xff]
      %v306 = vld [vmem:[#allocation13 + $0x8] sm:$0xff]
      %v307 = vld [vmem:[#allocation13 + $0x10] sm:$0xff]
      %v308 = vld [vmem:[#allocation13 + $0x18] sm:$0xff]
      %v309 = vlaneseq
      %v310 = vshrl.u32 %v309, 7
      %v311 = vsub.s32 0, %v310
      %v312 = vrot.slane %v214, %v311
      %314 = vbcast.lane.b32.xlu0 %v312, 256
      %v315 = vpop.permute.xlu0 %314
      %s317 = sor.u32 256, 8
      %318 = vbcast.lane.b32.xlu0 %v312, %s317
      %v319 = vpop.permute.xlu0 %318
      %s321 = sor.u32 256, 16
      %322 = vbcast.lane.b32.xlu0 %v312, %s321
      %v323 = vpop.permute.xlu0 %322
      %s325 = sor.u32 256, 24
      %326 = vbcast.lane.b32.xlu0 %v312, %s325
      %v327 = vpop.permute.xlu0 %326
      %v328 = vlaneseq
      %v329 = vshrl.u32 %v328, 7
      %v330 = vsub.s32 1, %v329
      %v331 = vrot.slane %v214, %v330
      %333 = vbcast.lane.b32.xlu0 %v331, 256
      %v334 = vpop.permute.xlu0 %333
      %s336 = sor.u32 256, 8
      %337 = vbcast.lane.b32.xlu0 %v331, %s336
      %v338 = vpop.permute.xlu0 %337
      %s340 = sor.u32 256, 16
      %341 = vbcast.lane.b32.xlu0 %v331, %s340
      %v342 = vpop.permute.xlu0 %341
      %s344 = sor.u32 256, 24
      %345 = vbcast.lane.b32.xlu0 %v331, %s344
      %v346 = vpop.permute.xlu0 %345
      %v347 = vld [vmem:[#allocation15] sm:$0xff]
      %v348 = vld [vmem:[#allocation15 + $0x8] sm:$0xff]
      %v349 = vld [vmem:[#allocation15 + $0x10] sm:$0xff]
      %v350 = vld [vmem:[#allocation15 + $0x18] sm:$0xff]
      %v351 = vmul.f32 %v315, %v347
      %v352 = vmul.f32 %v319, %v348
      %v353 = vmul.f32 %v323, %v349
      %v354 = vmul.f32 %v327, %v350
      %v355 = vmul.f32 %v334, %v347
      %v356 = vmul.f32 %v338, %v348
      %v357 = vmul.f32 %v342, %v349
      %v358 = vmul.f32 %v346, %v350
      %v359 = vadd.f32 %v305, %v351
      %v360 = vadd.f32 %v306, %v352
      %v361 = vadd.f32 %v307, %v353
      %v362 = vadd.f32 %v308, %v354
      %v363 = vadd.f32 %v305, %v355
      %v364 = vadd.f32 %v306, %v356
      %v365 = vadd.f32 %v307, %v357
      %v366 = vadd.f32 %v308, %v358
      %367 = vst [vmem:[#allocation4] sm:$0xff] %v359
      %368 = vst [vmem:[#allocation4 + $0x8] sm:$0xff] %v360
      %369 = vst [vmem:[#allocation4 + $0x10] sm:$0xff] %v361
      %370 = vst [vmem:[#allocation4 + $0x18] sm:$0xff] %v362
      %371 = vst [vmem:[#allocation4 + $0x20] sm:$0xff] %v363
      %372 = vst [vmem:[#allocation4 + $0x28] sm:$0xff] %v364
      %373 = vst [vmem:[#allocation4 + $0x30] sm:$0xff] %v365
      %374 = vst [vmem:[#allocation4 + $0x38] sm:$0xff] %v366
      %375 = vst.msk [vmem:[#allocation5] sm:$0x3] %vm217, 0.0
    $region81: #{tpu_custom_call.1} parent=1 // pred_fallthru
      _
    %v376 = vld [vmem:[#allocation7] sm:$0xff]
    %v377 = vld [vmem:[#allocation7 + $0x8] sm:$0xff]
    %v378 = vld [vmem:[#allocation4] sm:$0xff]
    %v379 = vld [vmem:[#allocation4 + $0x8] sm:$0xff]
    %v380 = vld [vmem:[#allocation4 + $0x10] sm:$0xff]
    %v381 = vld [vmem:[#allocation4 + $0x18] sm:$0xff]
    %v382 = vld [vmem:[#allocation4 + $0x20] sm:$0xff]
    %v383 = vld [vmem:[#allocation4 + $0x28] sm:$0xff]
    %v384 = vld [vmem:[#allocation4 + $0x30] sm:$0xff]
    %v385 = vld [vmem:[#allocation4 + $0x38] sm:$0xff]
    %v386 = vld [vmem:[#allocation3] sm:$0x3]
    %v389 = vunpack.c.l.s4 1966171168
    %v390 = vunpack.c.0.s8 %v389
    %v391 = vlaneseq
    %v392 = vshrl.u32 %v391, 7
    %v393 = vsub.s32 %v390, %v392
    %v394 = vrot.slane %v386, %v393
    %v395 = vcombine.high %v394, %v394
    %v397 = vunpack.c.l.s4 1966171168
    %v398 = vunpack.c.0.s8 %v397
    %v399 = vlaneseq
    %v400 = vshrl.u32 %v399, 7
    %v401 = vsub.s32 %v398, %v400
    %v402 = vrot.slane %v394, %v401
    %v404 = vunpack.c.l.s4 1966171168
    %v405 = vunpack.c.0.s8 %v404
    %v406 = vlaneseq
    %v407 = vshrl.u32 %v406, 7
    %v408 = vsub.s32 %v405, %v407
    %v409 = vrot.slane %v395, %v408
    %v410 = vlaneseq
    %v411 = vshrl.u32 %v410, 7
    %v412 = vsub.s32 0, %v411
    %v413 = vrot.slane %v402, %v412
    %v414 = vlaneseq
    %v415 = vshrl.u32 %v414, 7
    %v416 = vsub.s32 0, %v415
    %v417 = vrot.slane %v409, %v416
    %vm420 = vcmask 261120
    %v422 = vsel %vm420, %v376, 0
    %424 = vmatprep.subr.mxu0 0.0
    %425 = vmatpush1.msra.mxu0 %v378
    %426 = vmatprep.subr.mxu0 0.0
    %427 = vmatpush1.msra.mxu0 %v379
    %428 = vmatprep.subr.mxu0 0.0
    %429 = vmatpush1.msra.mxu0 %v380
    %430 = vmatprep.subr.mxu0 0.0
    %431 = vmatpush1.msra.mxu0 %v381
    %432 = vmatprep.subr.mxu0 0.0
    %433 = vmatpush1.msra.mxu0 0.0
    %434 = vmatprep.subr.mxu0 0.0
    %435 = vmatpush1.msra.mxu0 0.0
    %436 = vmatprep.subr.mxu0 0.0
    %437 = vmatpush1.msra.mxu0 0.0
    %438 = vmatprep.subr.mxu0 0.0
    %439 = vmatpush1.msra.mxu0 0.0
    %440 = vmatprep.subr.mxu0 0.0
    %441 = vmatpush1.msra.mxu0 0.0
    %442 = vmatprep.subr.mxu0 0.0
    %443 = vmatpush1.msra.mxu0 0.0
    %444 = vmatprep.subr.mxu0 0.0
    %445 = vmatpush1.msra.mxu0 0.0
    %446 = vmatprep.subr.mxu0 0.0
    %447 = vmatpush1.msra.mxu0 0.0
    %448 = vmatprep.subr.mxu0 0.0
    %449 = vmatpush1.msra.mxu0 0.0
    %450 = vmatprep.subr.mxu0 0.0
    %451 = vmatpush1.msra.mxu0 0.0
    %452 = vmatprep.subr.mxu0 0.0
    %453 = vmatpush1.msra.mxu0 0.0
    %454 = vmatprep.subr.mxu0 0.0
    %455 = vmatpush1.msra.mxu0 0.0
    %456 = vmatprep.subr.mxu0 0.0
    %457 = vmatpush1.msra.mxu0 0.0
    %458 = vmatprep.subr.mxu0 0.0
    %459 = vmatpush1.msra.mxu0 0.0
    %460 = vmatprep.subr.mxu0 0.0
    %461 = vmatpush1.msra.mxu0 0.0
    %462 = vmatprep.subr.mxu0 0.0
    %463 = vmatpush1.msra.mxu0 0.0
    %464 = vmatprep.subr.mxu0 0.0
    %465 = vmatpush1.msra.mxu0 0.0
    %466 = vmatprep.subr.mxu0 0.0
    %467 = vmatpush1.msra.mxu0 0.0
    %468 = vmatprep.subr.mxu0 0.0
    %469 = vmatpush1.msra.mxu0 0.0
    %470 = vmatprep.subr.mxu0 0.0
    %471 = vmatpush1.msra.mxu0 0.0
    %472 = vmatprep.subr.mxu0 0.0
    %473 = vmatpush1.msra.mxu0 0.0
    %474 = vmatprep.subr.mxu0 0.0
    %475 = vmatpush1.msra.mxu0 0.0
    %476 = vmatprep.subr.mxu0 0.0
    %477 = vmatpush1.msra.mxu0 0.0
    %478 = vmatprep.subr.mxu0 0.0
    %479 = vmatpush1.msra.mxu0 0.0
    %480 = vmatprep.subr.mxu0 0.0
    %481 = vmatpush1.msra.mxu0 0.0
    %482 = vmatprep.subr.mxu0 0.0
    %483 = vmatpush1.msra.mxu0 0.0
    %484 = vmatprep.subr.mxu0 0.0
    %485 = vmatpush1.msra.mxu0 0.0
    %486 = vmatprep.subr.mxu0 0.0
    %487 = vmatpush1.msra.mxu0 0.0
    %488 = vmatprep.mubr.f32.mxu0 0.0
    %489 = vmatmul.mubr.f32.gmra.mrb[0].mxu0 %v422
    %v490 = vpop.f32.mrb[0].mxu0
    %v491 = vadd.f32 %v413, %v490
    %v492 = vpop.f32.mrb[0].mxu0
    %493 = vdwg.mxu0
    %v495 = vsel %vm420, %v377, 0
    %497 = vmatprep.subr.mxu0 0.0
    %498 = vmatpush1.msra.mxu0 %v382
    %499 = vmatprep.subr.mxu0 0.0
    %500 = vmatpush1.msra.mxu0 %v383
    %501 = vmatprep.subr.mxu0 0.0
    %502 = vmatpush1.msra.mxu0 %v384
    %503 = vmatprep.subr.mxu0 0.0
    %504 = vmatpush1.msra.mxu0 %v385
    %505 = vmatprep.subr.mxu0 0.0
    %506 = vmatpush1.msra.mxu0 0.0
    %507 = vmatprep.subr.mxu0 0.0
    %508 = vmatpush1.msra.mxu0 0.0
    %509 = vmatprep.subr.mxu0 0.0
    %510 = vmatpush1.msra.mxu0 0.0
    %511 = vmatprep.subr.mxu0 0.0
    %512 = vmatpush1.msra.mxu0 0.0
    %513 = vmatprep.subr.mxu0 0.0
    %514 = vmatpush1.msra.mxu0 0.0
    %515 = vmatprep.subr.mxu0 0.0
    %516 = vmatpush1.msra.mxu0 0.0
    %517 = vmatprep.subr.mxu0 0.0
    %518 = vmatpush1.msra.mxu0 0.0
    %519 = vmatprep.subr.mxu0 0.0
    %520 = vmatpush1.msra.mxu0 0.0
    %521 = vmatprep.subr.mxu0 0.0
    %522 = vmatpush1.msra.mxu0 0.0
    %523 = vmatprep.subr.mxu0 0.0
    %524 = vmatpush1.msra.mxu0 0.0
    %525 = vmatprep.subr.mxu0 0.0
    %526 = vmatpush1.msra.mxu0 0.0
    %527 = vmatprep.subr.mxu0 0.0
    %528 = vmatpush1.msra.mxu0 0.0
    %529 = vmatprep.subr.mxu0 0.0
    %530 = vmatpush1.msra.mxu0 0.0
    %531 = vmatprep.subr.mxu0 0.0
    %532 = vmatpush1.msra.mxu0 0.0
    %533 = vmatprep.subr.mxu0 0.0
    %534 = vmatpush1.msra.mxu0 0.0
    %535 = vmatprep.subr.mxu0 0.0
    %536 = vmatpush1.msra.mxu0 0.0
    %537 = vmatprep.subr.mxu0 0.0
    %538 = vmatpush1.msra.mxu0 0.0
    %539 = vmatprep.subr.mxu0 0.0
    %540 = vmatpush1.msra.mxu0 0.0
    %541 = vmatprep.subr.mxu0 0.0
    %542 = vmatpush1.msra.mxu0 0.0
    %543 = vmatprep.subr.mxu0 0.0
    %544 = vmatpush1.msra.mxu0 0.0
    %545 = vmatprep.subr.mxu0 0.0
    %546 = vmatpush1.msra.mxu0 0.0
    %547 = vmatprep.subr.mxu0 0.0
    %548 = vmatpush1.msra.mxu0 0.0
    %549 = vmatprep.subr.mxu0 0.0
    %550 = vmatpush1.msra.mxu0 0.0
    %551 = vmatprep.subr.mxu0 0.0
    %552 = vmatpush1.msra.mxu0 0.0
    %553 = vmatprep.subr.mxu0 0.0
    %554 = vmatpush1.msra.mxu0 0.0
    %555 = vmatprep.subr.mxu0 0.0
    %556 = vmatpush1.msra.mxu0 0.0
    %557 = vmatprep.subr.mxu0 0.0
    %558 = vmatpush1.msra.mxu0 0.0
    %559 = vmatprep.subr.mxu0 0.0
    %560 = vmatpush1.msra.mxu0 0.0
    %561 = vmatprep.mubr.f32.mxu0 0.0
    %562 = vmatmul.mubr.f32.gmra.mrb[0].mxu0 %v495
    %v563 = vpop.f32.mrb[0].mxu0
    %v564 = vadd.f32 %v417, %v563
    %v565 = vpop.f32.mrb[0].mxu0
    %566 = vdwg.mxu0
    %v567 = vmul.f32 %v491, 0.01
    %v568 = vmul.f32 %v564, 0.01
    %v569 = vmax.f32 %v491, %v567
    %v570 = vmax.f32 %v564, %v568
    %v571 = vld [vmem:[%s8] sm:$0x1]
    %v573 = vlaneseq
    %v574 = vshrl.u32 %v573, 7
    %v575 = vsub.s32 0, %v574
    %v576 = vrot.slane %v571, %v575
    %v578 = vmul.f32 %v569, %v576
    %v579 = vmul.f32 %v570, %v576
    %580 = vadd.xlane.f32.xlu0 %v578
    %v581 = vpop.xlane.xlu0 %580
    %582 = vadd.xlane.f32.xlu0 %v579
    %v583 = vpop.xlane.xlu0 %582
    %v584 = vld [vmem:[#allocation6] sm:$0x1]
    %v586 = vlaneseq
    %v587 = vshrl.u32 %v586, 7
    %v588 = vsub.s32 0, %v587
    %v589 = vrot.slane %v584, %v588
    %v591 = vadd.f32 %v581, %v589
    %v592 = vadd.f32 %v583, %v589
    %v593 = vld [vmem:[#allocation5] sm:$0x3]
    %595 = vset.pattern.permute.xlu0 0
    %596 = vperm.xlu0 %595, %v591
    %v597 = vpop.permute.xlu0 %596
    %600 = vset.pattern.permute.xlu0 0
    %601 = vperm.xlu0 %600, %v592
    %v602 = vpop.permute.xlu0 %601
    %v604 = vmul.f32 %v376, %v597
    %v605 = vmul.f32 %v377, %v602
    %v606 = vsel %vm420, %v604, 0.0
    %v607 = vrot.slane %v606, 4
    %v608 = vadd.f32 %v606, %v607
    %v609 = vrot.slane %v608, 2
    %v610 = vadd.f32 %v608, %v609
    %v611 = vrot.slane %v610, 1
    %v612 = vadd.f32 %v610, %v611
    %v613 = vsel %vm420, %v605, 0.0
    %v614 = vrot.slane %v613, 4
    %v615 = vadd.f32 %v613, %v614
    %v616 = vrot.slane %v615, 2
    %v617 = vadd.f32 %v615, %v616
    %v618 = vrot.slane %v617, 1
    %v619 = vadd.f32 %v617, %v618
    %vm622 = vcmask 1041409
    %v623 = vsel %vm622, %v619, %v612
    %v625 = vadd.f32 %v593, %v623
    %vm626 = vcmask 254976
    %627 = vst.msk [vmem:[#allocation5] sm:$0x3] %vm626, %v625
    // Predicated region
    $region82: #{tpu_custom_call.1} parent=1 // pred_check
      %p628 = pneg %p129
    $region83: #{tpu_custom_call.1} parent=1 // pred_check_branch
      %630 = sbr.rel (%p628) target = $region85
    $region84: #{tpu_custom_call.1} parent=1 // pred_region
      %v631 = vld [vmem:[#allocation5] sm:$0x3]
      %v632 = vld [vmem:[%s10] sm:$0xff]
      %v633 = vld [vmem:[%s10 + $0x8] sm:$0xff]
      %v634 = vld [vmem:[%s10 + $0x10] sm:$0xff]
      %v635 = vld [vmem:[%s10 + $0x18] sm:$0xff]
      %v636 = vld [vmem:[#allocation2] sm:$0x3]
      %v637 = vld [vmem:[#allocation16] sm:$0xff]
      %v638 = vld [vmem:[#allocation16 + $0x8] sm:$0xff]
      %v639 = vld [vmem:[#allocation16 + $0x10] sm:$0xff]
      %v640 = vld [vmem:[#allocation16 + $0x18] sm:$0xff]
      %v642 = vsel %vm420, %v636, 0
      %644 = vmatprep.subr.mxu0 0.0
      %645 = vmatpush1.msra.mxu0 %v637
      %646 = vmatprep.subr.mxu0 0.0
      %647 = vmatpush1.msra.mxu0 %v638
      %648 = vmatprep.subr.mxu0 0.0
      %649 = vmatpush1.msra.mxu0 %v639
      %650 = vmatprep.subr.mxu0 0.0
      %651 = vmatpush1.msra.mxu0 %v640
      %652 = vmatprep.subr.mxu0 0.0
      %653 = vmatpush1.msra.mxu0 0.0
      %654 = vmatprep.subr.mxu0 0.0
      %655 = vmatpush1.msra.mxu0 0.0
      %656 = vmatprep.subr.mxu0 0.0
      %657 = vmatpush1.msra.mxu0 0.0
      %658 = vmatprep.subr.mxu0 0.0
      %659 = vmatpush1.msra.mxu0 0.0
      %660 = vmatprep.subr.mxu0 0.0
      %661 = vmatpush1.msra.mxu0 0.0
      %662 = vmatprep.subr.mxu0 0.0
      %663 = vmatpush1.msra.mxu0 0.0
      %664 = vmatprep.subr.mxu0 0.0
      %665 = vmatpush1.msra.mxu0 0.0
      %666 = vmatprep.subr.mxu0 0.0
      %667 = vmatpush1.msra.mxu0 0.0
      %668 = vmatprep.subr.mxu0 0.0
      %669 = vmatpush1.msra.mxu0 0.0
      %670 = vmatprep.subr.mxu0 0.0
      %671 = vmatpush1.msra.mxu0 0.0
      %672 = vmatprep.subr.mxu0 0.0
      %673 = vmatpush1.msra.mxu0 0.0
      %674 = vmatprep.subr.mxu0 0.0
      %675 = vmatpush1.msra.mxu0 0.0
      %676 = vmatprep.subr.mxu0 0.0
      %677 = vmatpush1.msra.mxu0 0.0
      %678 = vmatprep.subr.mxu0 0.0
      %679 = vmatpush1.msra.mxu0 0.0
      %680 = vmatprep.subr.mxu0 0.0
      %681 = vmatpush1.msra.mxu0 0.0
      %682 = vmatprep.subr.mxu0 0.0
      %683 = vmatpush1.msra.mxu0 0.0
      %684 = vmatprep.subr.mxu0 0.0
      %685 = vmatpush1.msra.mxu0 0.0
      %686 = vmatprep.subr.mxu0 0.0
      %687 = vmatpush1.msra.mxu0 0.0
      %688 = vmatprep.subr.mxu0 0.0
      %689 = vmatpush1.msra.mxu0 0.0
      %690 = vmatprep.subr.mxu0 0.0
      %691 = vmatpush1.msra.mxu0 0.0
      %692 = vmatprep.subr.mxu0 0.0
      %693 = vmatpush1.msra.mxu0 0.0
      %694 = vmatprep.subr.mxu0 0.0
      %695 = vmatpush1.msra.mxu0 0.0
      %696 = vmatprep.subr.mxu0 0.0
      %697 = vmatpush1.msra.mxu0 0.0
      %698 = vmatprep.subr.mxu0 0.0
      %699 = vmatpush1.msra.mxu0 0.0
      %700 = vmatprep.subr.mxu0 0.0
      %701 = vmatpush1.msra.mxu0 0.0
      %702 = vmatprep.subr.mxu0 0.0
      %703 = vmatpush1.msra.mxu0 0.0
      %704 = vmatprep.subr.mxu0 0.0
      %705 = vmatpush1.msra.mxu0 0.0
      %706 = vmatprep.subr.mxu0 0.0
      %707 = vmatpush1.msra.mxu0 0.0
      %708 = vmatprep.mubr.f32.mxu0 0.0
      %709 = vmatmul.mubr.f32.gmra.mrb[0].mxu0 %v642
      %v710 = vpop.f32.mrb[0].mxu0
      %v711 = vadd.f32 0.0, %v710
      %v712 = vpop.f32.mrb[0].mxu0
      %713 = vdwg.mxu0
      %v715 = vsel %vm420, %v631, 0
      %717 = vmatprep.subr.mxu0 0.0
      %718 = vmatpush1.msra.mxu0 %v632
      %719 = vmatprep.subr.mxu0 0.0
      %720 = vmatpush1.msra.mxu0 %v633
      %721 = vmatprep.subr.mxu0 0.0
      %722 = vmatpush1.msra.mxu0 %v634
      %723 = vmatprep.subr.mxu0 0.0
      %724 = vmatpush1.msra.mxu0 %v635
      %725 = vmatprep.subr.mxu0 0.0
      %726 = vmatpush1.msra.mxu0 0.0
      %727 = vmatprep.subr.mxu0 0.0
      %728 = vmatpush1.msra.mxu0 0.0
      %729 = vmatprep.subr.mxu0 0.0
      %730 = vmatpush1.msra.mxu0 0.0
      %731 = vmatprep.subr.mxu0 0.0
      %732 = vmatpush1.msra.mxu0 0.0
      %733 = vmatprep.subr.mxu0 0.0
      %734 = vmatpush1.msra.mxu0 0.0
      %735 = vmatprep.subr.mxu0 0.0
      %736 = vmatpush1.msra.mxu0 0.0
      %737 = vmatprep.subr.mxu0 0.0
      %738 = vmatpush1.msra.mxu0 0.0
      %739 = vmatprep.subr.mxu0 0.0
      %740 = vmatpush1.msra.mxu0 0.0
      %741 = vmatprep.subr.mxu0 0.0
      %742 = vmatpush1.msra.mxu0 0.0
      %743 = vmatprep.subr.mxu0 0.0
      %744 = vmatpush1.msra.mxu0 0.0
      %745 = vmatprep.subr.mxu0 0.0
      %746 = vmatpush1.msra.mxu0 0.0
      %747 = vmatprep.subr.mxu0 0.0
      %748 = vmatpush1.msra.mxu0 0.0
      %749 = vmatprep.subr.mxu0 0.0
      %750 = vmatpush1.msra.mxu0 0.0
      %751 = vmatprep.subr.mxu0 0.0
      %752 = vmatpush1.msra.mxu0 0.0
      %753 = vmatprep.subr.mxu0 0.0
      %754 = vmatpush1.msra.mxu0 0.0
      %755 = vmatprep.subr.mxu0 0.0
      %756 = vmatpush1.msra.mxu0 0.0
      %757 = vmatprep.subr.mxu0 0.0
      %758 = vmatpush1.msra.mxu0 0.0
      %759 = vmatprep.subr.mxu0 0.0
      %760 = vmatpush1.msra.mxu0 0.0
      %761 = vmatprep.subr.mxu0 0.0
      %762 = vmatpush1.msra.mxu0 0.0
      %763 = vmatprep.subr.mxu0 0.0
      %764 = vmatpush1.msra.mxu0 0.0
      %765 = vmatprep.subr.mxu0 0.0
      %766 = vmatpush1.msra.mxu0 0.0
      %767 = vmatprep.subr.mxu0 0.0
      %768 = vmatpush1.msra.mxu0 0.0
      %769 = vmatprep.subr.mxu0 0.0
      %770 = vmatpush1.msra.mxu0 0.0
      %771 = vmatprep.subr.mxu0 0.0
      %772 = vmatpush1.msra.mxu0 0.0
      %773 = vmatprep.subr.mxu0 0.0
      %774 = vmatpush1.msra.mxu0 0.0
      %775 = vmatprep.subr.mxu0 0.0
      %776 = vmatpush1.msra.mxu0 0.0
      %777 = vmatprep.subr.mxu0 0.0
      %778 = vmatpush1.msra.mxu0 0.0
      %779 = vmatprep.subr.mxu0 0.0
      %780 = vmatpush1.msra.mxu0 0.0
      %781 = vmatprep.mubr.f32.mxu0 0.0
      %782 = vmatmul.mubr.f32.gmra.mrb[0].mxu0 %v715
      %v783 = vpop.f32.mrb[0].mxu0
      %v784 = vadd.f32 %v711, %v783
      %v785 = vpop.f32.mrb[0].mxu0
      %786 = vdwg.mxu0
      %v787 = vld [vmem:[%s12] sm:$0x1]
      %v789 = vlaneseq
      %v790 = vshrl.u32 %v789, 7
      %v791 = vsub.s32 0, %v790
      %v792 = vrot.slane %v787, %v791
      %v794 = vadd.f32 %v784, %v792
      %795 = vst.msk [vmem:[#allocation18] sm:$0x3] %vm626, %v794
    $region85: #{tpu_custom_call.1} parent=1 // pred_fallthru
      _
    // Predicated region
    $region86: #{tpu_custom_call.1} parent=1 // pred_check
      _
    $region87: #{tpu_custom_call.1} parent=1 // pred_check_branch
      %797 = sbr.rel (0) target = $region89
    $region88: #{tpu_custom_call.1} parent=1 // pred_region
      %s799 = ssub.s32 32, 32
      %800 = vsyncadd [#allocation9], %s799
      %s802 = sshll.u32 [#allocation18], 4
      %s803 = int_to_ptr.vmem [resolvable:$true] %s802
      %805 = dma.vmem_to_hbm [thread:$0]  %s803, 32, %s13, [#allocation9]
    $region89: #{tpu_custom_call.1} parent=1 // pred_fallthru
      _
    // Predicated region
    $region90: #{tpu_custom_call.1} parent=1 // pred_check
      _
    $region91: #{tpu_custom_call.1} parent=1 // pred_check_branch
      %807 = sbr.rel (0) target = $region93
    $region92: #{tpu_custom_call.1} parent=1 // pred_region
      %808 = dma.done [#allocation9], 32
    $region93: #{tpu_custom_call.1} parent=1 // pred_fallthru
      _
    %809 = vsyncpa [#allocation8], 1
    %810 = vsyncpa [#allocation11], 1
    %811 = vsyncpa [#allocation14], 1
    %812 = vsyncpa [#allocation17], 1
    %813 = vsyncpa [#allocation9], 1

</llo_original>
